<compile_context>
chip_gen: v7x
topology: tpu7x:2x2x1
jax: 0.10.0
libtpu: 0.0.40
codegen_flags: <defaults>
</compile_context>

<pallas_src>
import functools
import math

import jax
import jax.numpy as jnp
from jax.experimental import pallas as pl
from jax.experimental.pallas import tpu as pltpu


def _extract_patches(x_nchw, patch_size):
    """NCHW image -> (B, N, K) patch rows, row-major over the patch grid.

    Matches Conv2d(stride=patch) -> Flatten(2) -> permute(0, 2, 1): each row is
    the flattened (C, p, p) receptive field of one output location.
    """
    B, C, H, W = x_nchw.shape
    p = patch_size
    Hp, Wp = H // p, W // p
    x = x_nchw.reshape(B, C, Hp, p, Wp, p)
    x = x.transpose(0, 2, 4, 1, 3, 5)            # (B, Hp, Wp, C, p, p)
    return x.reshape(B, Hp * Wp, C * p * p)      # (B, N, K)


def _patch_embed_kernel(x_ref, w_ref, posb_ref, o_ref):
    # x_ref:    (TM, K)     bf16  fused (image, row) patch rows for this block
    #                             (row N of each image is all zeros -> cls slot)
    # w_ref:    (K,  E_pad) bf16  flattened Conv2d weight (invariant, fetched once)
    # posb_ref: (TM, E_pad) f32   per-row (pos + bias) / (cls + pos) table
    # o_ref:    (TM, E_pad) f32   output rows (lane-dense, unmasked stores)
    proj = jnp.dot(x_ref[...], w_ref[...], preferred_element_type=jnp.float32)
    o_ref[...] = (proj + posb_ref[...]).astype(o_ref.dtype)   # single full-tile store


def patch_embedding_forward(x_nchw, conv_w, conv_b, cls_token, pos_emb,
                            patch_size, *, target_block_rows=512):
    """x_nchw: (B, C, H, W) f32; conv_w: (E, C, p, p); conv_b: (E,)
       cls_token: (1, 1, E); pos_emb: (1, N+1, E)  ->  (B, N+1, E) f32."""
    B, C, H, W = x_nchw.shape
    p = patch_size
    E = conv_w.shape[0]
    Hp, Wp = H // p, W // p
    N = Hp * Wp
    K = C * p * p
    R = N + 1                                    # rows per image in the output

    # Lane-dense output width: pad E up to a multiple of 128 so stores are
    # full-lane (no vst.msk).  No-op when E is already 128-aligned.
    E_pad = -(-E // 128) * 128

    # ---------------- host-side prep (layout + batch-invariant math) --------
    patches = _extract_patches(x_nchw, p)                        # (B, N, K)
    w_mat = conv_w.reshape(E, K).T.astype(jnp.bfloat16)          # (K, E) bf16
    w_mat = jnp.pad(w_mat, ((0, 0), (0, E_pad - E)))             # (K, E_pad)

    pos = pos_emb.reshape(R, E).astype(jnp.float32)
    posb = jnp.concatenate(
        [pos[:N] + conv_b.reshape(1, E).astype(jnp.float32),     # rows 0..N-1
         pos[N:] + cls_token.reshape(1, E).astype(jnp.float32)], # row N (cls)
        axis=0)                                                  # (R, E) f32
    posb = jnp.pad(posb, ((0, 0), (0, E_pad - E)))               # (R, E_pad)

    # ---------------- block sizing: fuse images into ~target_block_rows -----
    b_blk = max(1, -(-target_block_rows // R))          # images per grid step
    if b_blk >= B:
        b_blk, n_blocks = B, 1
    else:
        q = 8 // math.gcd(R, 8)                         # keep TM 8-aligned
        b_blk = -(-b_blk // q) * q
        if b_blk >= B:
            b_blk, n_blocks = B, 1
        else:
            n_blocks = -(-B // b_blk)
    B_pad = b_blk * n_blocks
    TM = b_blk * R                                      # rows per grid step

    # Append one zero row per image (becomes the cls row after the GEMM),
    # pad the batch to whole blocks, and flatten to a 2-D (M, K) operand.
    patches = jnp.pad(patches, ((0, B_pad - B), (0, 1), (0, 0)))
    patches2d = patches.reshape(B_pad * R, K).astype(jnp.bfloat16)    # (M, K)
    posb_blk = jnp.tile(posb, (b_blk, 1))                             # (TM, E_pad)

    out2d = pl.pallas_call(
        _patch_embed_kernel,
        out_shape=jax.ShapeDtypeStruct((B_pad * R, E_pad), jnp.float32),
        grid_spec=pltpu.PrefetchScalarGridSpec(
            num_scalar_prefetch=0,
            grid=(n_blocks,),
            in_specs=[
                pl.BlockSpec((TM, K), lambda i: (i, 0)),       # streamed row tiles
                pl.BlockSpec((K, E_pad), lambda i: (0, 0)),    # invariant weight
                pl.BlockSpec((TM, E_pad), lambda i: (0, 0)),   # invariant pos+bias
            ],
            out_specs=pl.BlockSpec((TM, E_pad), lambda i: (i, 0)),
        ),
        compiler_params=pltpu.CompilerParams(
            # Fused row-tile axis is the parallel axis (load-balances the two
            # TensorCores on v7x even for small / odd batch sizes).
            dimension_semantics=("parallel",),
            # Allow XLA to fuse the im2col transpose/pad into the operand DMA
            # instead of a standalone HBM round trip for the patch tensor.
            allow_input_fusion=[True, False, False],
            vmem_limit_bytes=32 * 1024 * 1024,
        ),
    )(patches2d, w_mat, posb_blk)

    return out2d.reshape(B_pad, R, E_pad)[:B, :, :E]


def _reference(x_nchw, conv_w, conv_b, cls_token, pos_emb, patch_size,
               compute_dtype=jnp.float32):
    """Pure-JAX reference matching the PyTorch forward (eval-mode dropout)."""
    B, C, H, W = x_nchw.shape
    p = patch_size
    E = conv_w.shape[0]
    patches = _extract_patches(x_nchw, p).astype(compute_dtype)        # (B,N,K)
    w = conv_w.reshape(E, -1).T.astype(compute_dtype)                  # (K,E)
    proj = jnp.dot(patches, w, preferred_element_type=jnp.float32) + conv_b
    cls = jnp.broadcast_to(cls_token, (B, 1, E)).astype(jnp.float32)
    seq = jnp.concatenate([proj, cls], axis=1)                         # cls LAST
    return seq + pos_emb


if __name__ == "__main__":
    # Small ViT-ish config: batch=2, channels=4, image 16x16, patch 4 -> 16 patches, embed 32
    B, C, H, W = 2, 4, 16, 16
    patch_size = 4
    embed_dim = 32
    num_patches = (H // patch_size) * (W // patch_size)

    key = jax.random.PRNGKey(0)
    kx, kw, kb, kc, kp = jax.random.split(key, 5)
    x = jax.random.normal(kx, (B, C, H, W), dtype=jnp.float32)
    conv_w = jax.random.normal(kw, (embed_dim, C, patch_size, patch_size),
                               dtype=jnp.float32) * 0.02
    conv_b = jax.random.normal(kb, (embed_dim,), dtype=jnp.float32) * 0.02
    cls_token = jax.random.normal(kc, (1, 1, embed_dim), dtype=jnp.float32)
    pos_emb = jax.random.normal(kp, (1, num_patches + 1, embed_dim), dtype=jnp.float32)

    # jit the whole wrapper so the host-side im2col / pad / cast fuse with the
    # pallas_call operands (allow_input_fusion) instead of running eagerly.
    fwd = jax.jit(functools.partial(patch_embedding_forward, patch_size=patch_size))
    out = jax.block_until_ready(fwd(x, conv_w, conv_b, cls_token, pos_emb))
    assert out.shape == (B, num_patches + 1, embed_dim), out.shape

    # Tight check vs a reference using the same bf16 MXU operands (f32 accum).
    ref_bf16 = _reference(x, conv_w, conv_b, cls_token, pos_emb, patch_size,
                          compute_dtype=jnp.bfloat16)
    assert jnp.allclose(out, ref_bf16, atol=1e-3, rtol=1e-3), "mismatch vs bf16-operand reference"

    # Loose check vs exact f32 module semantics (only bf16 input rounding differs).
    ref_f32 = _reference(x, conv_w, conv_b, cls_token, pos_emb, patch_size,
                         compute_dtype=jnp.float32)
    assert jnp.allclose(out, ref_f32, atol=2e-2, rtol=2e-2), "mismatch vs f32 reference"

    print("KERNEL_OK")
</pallas_src>

<mosaic_0001>
module attributes {stable_mosaic.version = 11 : i64} {
  func.func @_patch_embed_kernel(%arg0: i32, %arg1: memref<34x64xbf16, #tpu.memory_space<vmem>>, %arg2: memref<64x128xbf16, #tpu.memory_space<vmem>>, %arg3: memref<34x128xf32, #tpu.memory_space<vmem>>, %arg4: memref<34x128xf32, #tpu.memory_space<vmem>>) attributes {dimension_semantics = [#tpu.dimension_semantics<parallel>], iteration_bounds = array<i64: 1>, scalar_prefetch = 0 : i64, scratch_operands = 0 : i64, tpu.core_type = #tpu.core_type<tc>, window_params = [{transform_indices = @transform_0, window_bounds = array<i64: 34, 64>}, {pipeline_mode = #tpu.pipeline_mode<synchronous>, transform_indices = @transform_1, window_bounds = array<i64: 64, 128>}, {pipeline_mode = #tpu.pipeline_mode<synchronous>, transform_indices = @transform_2, window_bounds = array<i64: 34, 128>}, {transform_indices = @transform_3, window_bounds = array<i64: 34, 128>}]} {
    %c0 = arith.constant 0 : index
    %c0_0 = arith.constant 0 : index
    %0 = vector.load %arg1[%c0, %c0_0] : memref<34x64xbf16, #tpu.memory_space<vmem>>, vector<34x64xbf16>
    %c0_1 = arith.constant 0 : index
    %c0_2 = arith.constant 0 : index
    %1 = vector.load %arg2[%c0_1, %c0_2] : memref<64x128xbf16, #tpu.memory_space<vmem>>, vector<64x128xbf16>
    %cst = arith.constant dense<0.000000e+00> : vector<34x128xf32>
    %2 = tpu.matmul %0, %1, %cst {dimension_numbers = #tpu.dot_dimension_numbers<[1], [0], [0], [1], [0, 0, 1, 1], [], []>} : vector<34x64xbf16>, vector<64x128xbf16>, vector<34x128xf32> -> vector<34x128xf32>
    %c0_3 = arith.constant 0 : index
    %c0_4 = arith.constant 0 : index
    %3 = vector.load %arg3[%c0_3, %c0_4] : memref<34x128xf32, #tpu.memory_space<vmem>>, vector<34x128xf32>
    %4 = arith.addf %2, %3 : vector<34x128xf32>
    %c0_5 = arith.constant 0 : index
    %c0_6 = arith.constant 0 : index
    %5 = vector.load %arg4[%c0_5, %c0_6] : memref<34x128xf32, #tpu.memory_space<vmem>>, vector<34x128xf32>
    tpu.vector_store %arg4[%c0_5, %c0_6], %4 {strides = array<i32>} : memref<34x128xf32, #tpu.memory_space<vmem>>, vector<34x128xf32>,
    return
  }
  func.func @transform_0(%arg0: i32) -> (i32, i32) {
    %c0_i32 = arith.constant 0 : i32
    %c0_i32_0 = arith.constant 0 : i32
    return %arg0, %c0_i32 : i32, i32
  }
  func.func @transform_1(%arg0: i32) -> (i32, i32) {
    %c0_i32 = arith.constant 0 : i32
    %c0_i32_0 = arith.constant 0 : i32
    %c0_i32_1 = arith.constant 0 : i32
    return %c0_i32, %c0_i32_0 : i32, i32
  }
  func.func @transform_2(%arg0: i32) -> (i32, i32) {
    %c0_i32 = arith.constant 0 : i32
    %c0_i32_0 = arith.constant 0 : i32
    %c0_i32_1 = arith.constant 0 : i32
    return %c0_i32, %c0_i32_0 : i32, i32
  }
  func.func @transform_3(%arg0: i32) -> (i32, i32) {
    %c0_i32 = arith.constant 0 : i32
    %c0_i32_0 = arith.constant 0 : i32
    return %arg0, %c0_i32 : i32, i32
  }
}

</mosaic_0001>

<llo_original>
// kernel: tile.9
$region0: #{tile.9}
  %s0 = inlined_call_operand.vmem [shape: f32[2,17,128], index: 0, kind: input, shape index: {}]
  %s1 = inlined_call_operand.vmem [shape: f32[34,128], index: 1, kind: output, shape index: {}]
  %v2 = vld [vmem:[%s0] sm:$0xff]
  %3 = vst [vmem:[%s1] sm:$0xff] %v2
  %s4 = scalar_lea.vmem %s0, 8
  %v5 = vld [vmem:[%s4] sm:$0xff]
  %s6 = scalar_lea.vmem %s1, 8
  %7 = vst [vmem:[%s6] sm:$0xff] %v5
  %s8 = scalar_lea.vmem %s0, 16
  %s9 = smov 3
  %v10 = vld [vmem:[%s8] ss:$8 sm:%s9]
  %s11 = scalar_lea.vmem %s1, 16
  %12 = vst [vmem:[%s11] sm:$0x3] %v10
  %s13 = scalar_lea.vmem %s0, 25
  %v14 = vld [vmem:[%s13] sm:$0xff]
  %s15 = scalar_lea.vmem %s1, 18
  %16 = vst [vmem:[%s15] sm:$0xff] %v14
  %s17 = scalar_lea.vmem %s0, 33
  %v18 = vld [vmem:[%s17] sm:$0xff]
  %s19 = scalar_lea.vmem %s1, 26
  %20 = vst [vmem:[%s19] sm:$0xff] %v18

// kernel: patch_embedding_forward.1
$region0: #{patch_embedding_forward.1}
  #allocation0 [shape = 'u32[]', space=smem, size = 0x4, offset = 0x4, fixed_abs, tag = 'smem constant byte address 0x4 - core index']
  #allocation1 [shape = 'u32[144,128]{1,0:T(1,128)}', space=vmem, size = 0x12000, scoped, tag = 'internal scratch']
  %s0 = inlined_call_operand.vmem [shape: bf16[34,64], index: 0, kind: input, shape index: {}]
  %s1 = inlined_call_operand.vmem [shape: bf16[64,128], index: 1, kind: input, shape index: {}]
  %s2 = inlined_call_operand.vmem [shape: f32[34,128], index: 2, kind: input, shape index: {}]
  %s3 = inlined_call_operand.vmem [shape: f32[34,128], index: 3, kind: output, shape index: {}]
  %s4 = sld [smem:[#allocation0]]
  $region22: #{patch_embedding_forward.1} parent=0
    _
  %s6 = ssub.s32 1, %s4
  %s7 = scalar_select 0, %s6, %s4
  // Predicated region
  $region2: #{patch_embedding_forward.1} parent=0 // pred_check
    _
  $region3: #{patch_embedding_forward.1} parent=0 // pred_check_branch
    %9 = sbr.rel (0) target = $region5
  $region4: #{patch_embedding_forward.1} parent=0 // pred_region
    _
  $region5: #{patch_embedding_forward.1} parent=0 // pred_fallthru
    _
  // Predicated region
  $region6: #{patch_embedding_forward.1} parent=0 // pred_check
    _
  $region7: #{patch_embedding_forward.1} parent=0 // pred_check_branch
    %11 = sbr.rel (0) target = $region9
  $region8: #{patch_embedding_forward.1} parent=0 // pred_region
    _
  $region9: #{patch_embedding_forward.1} parent=0 // pred_fallthru
    _
  // Predicated region
  $region10: #{patch_embedding_forward.1} parent=0 // pred_check
    _
  $region11: #{patch_embedding_forward.1} parent=0 // pred_check_branch
    %13 = sbr.rel (0) target = $region13
  $region12: #{patch_embedding_forward.1} parent=0 // pred_region
    _
  $region13: #{patch_embedding_forward.1} parent=0 // pred_fallthru
    _
  %v15 = vld [vmem:[%s0] sm:$0xf]
  %v16 = vld [vmem:[%s0 + $0x4] sm:$0xf]
  %v17 = vld [vmem:[%s0 + $0x8] sm:$0xf]
  %v18 = vld [vmem:[%s0 + $0xc] sm:$0xf]
  %v19 = vld [vmem:[%s0 + $0x10] sm:$0x1]
  %v20 = vld [vmem:[%s1] sm:$0xf]
  %v21 = vld [vmem:[%s1 + $0x4] sm:$0xf]
  %v22 = vld [vmem:[%s1 + $0x8] sm:$0xf]
  %v23 = vld [vmem:[%s1 + $0xc] sm:$0xf]
  %v24 = vld [vmem:[%s1 + $0x10] sm:$0xf]
  %v25 = vld [vmem:[%s1 + $0x14] sm:$0xf]
  %v26 = vld [vmem:[%s1 + $0x18] sm:$0xf]
  %v27 = vld [vmem:[%s1 + $0x1c] sm:$0xf]
  %v28 = vld [vmem:[%s2] sm:$0xff]
  %v29 = vld [vmem:[%s2 + $0x8] sm:$0xff]
  %v30 = vld [vmem:[%s2 + $0x10] sm:$0xff]
  %v31 = vld [vmem:[%s2 + $0x18] sm:$0xff]
  %v32 = vld [vmem:[%s2 + $0x20] sm:$0x3]
  %v38 = vunpack.c.l.b16 %v15
  %v39 = vunpack.c.l.b16 %v16
  %v40 = vunpack.c.l.b16 %v17
  %v41 = vunpack.c.l.b16 %v18
  %v42 = vunpack.c.l.b16 %v19
  %v43 = vpack.c.b16 %v39, %v38
  %v44 = vpack.c.b16 %v41, %v40
  %v45 = vpack.c.b16 %v42, %v42
  %v54 = vunpack.c.l.b16 %v20
  %v55 = vunpack.c.l.b16 %v21
  %v56 = vunpack.c.l.b16 %v22
  %v57 = vunpack.c.l.b16 %v23
  %v58 = vunpack.c.l.b16 %v24
  %v59 = vunpack.c.l.b16 %v25
  %v60 = vunpack.c.l.b16 %v26
  %v61 = vunpack.c.l.b16 %v27
  %v62 = vpack.c.b16 %v55, %v54
  %v63 = vpack.c.b16 %v57, %v56
  %v64 = vpack.c.b16 %v59, %v58
  %v65 = vpack.c.b16 %v61, %v60
  %vm70 = vcmask 523264
  %v72 = vsel %vm70, %v43, 0
  %v75 = vsel %vm70, %v44, 0
  %v78 = vsel %vm70, %v45, 0
  %80 = vmatprep.subr.bf16.mxu0 0
  %81 = vmatpush1.bf16.msra.mxu0 %v62
  %82 = vmatprep.subr.bf16.mxu0 0
  %83 = vmatpush1.bf16.msra.mxu0 %v63
  %84 = vmatprep.subr.bf16.mxu0 0
  %85 = vmatpush1.bf16.msra.mxu0 %v64
  %86 = vmatprep.subr.bf16.mxu0 0
  %87 = vmatpush1.bf16.msra.mxu0 %v65
  %88 = vmatprep.subr.bf16.mxu0 0
  %89 = vmatpush1.bf16.msra.mxu0 0
  %90 = vmatprep.subr.bf16.mxu0 0
  %91 = vmatpush1.bf16.msra.mxu0 0
  %92 = vmatprep.subr.bf16.mxu0 0
  %93 = vmatpush1.bf16.msra.mxu0 0
  %94 = vmatprep.subr.bf16.mxu0 0
  %95 = vmatpush1.bf16.msra.mxu0 0
  %96 = vmatprep.subr.bf16.mxu0 0
  %97 = vmatpush1.bf16.msra.mxu0 0
  %98 = vmatprep.subr.bf16.mxu0 0
  %99 = vmatpush1.bf16.msra.mxu0 0
  %100 = vmatprep.subr.bf16.mxu0 0
  %101 = vmatpush1.bf16.msra.mxu0 0
  %102 = vmatprep.subr.bf16.mxu0 0
  %103 = vmatpush1.bf16.msra.mxu0 0
  %104 = vmatprep.subr.bf16.mxu0 0
  %105 = vmatpush1.bf16.msra.mxu0 0
  %106 = vmatprep.subr.bf16.mxu0 0
  %107 = vmatpush1.bf16.msra.mxu0 0
  %108 = vmatprep.subr.bf16.mxu0 0
  %109 = vmatpush1.bf16.msra.mxu0 0
  %110 = vmatprep.subr.bf16.mxu0 0
  %111 = vmatpush1.bf16.msra.mxu0 0
  %112 = vmatprep.mubr.bf16.mxu0 0
  %113 = vmatmul.mubr.bf16.gmra.mrb[0].mxu0 %v72
  %v114 = vpop.f32.mrb[0].mxu0
  %v115 = vadd.f32 %v28, %v114
  %v116 = vpop.f32.mrb[0].mxu0
  %v117 = vpop.f32.mrb[0].mxu0
  %v118 = vadd.f32 %v29, %v117
  %v119 = vpop.f32.mrb[0].mxu0
  %120 = vmatprep.mubr.bf16.mxu0 0
  %121 = vmatmul.mubr.bf16.gmra.mrb[0].mxu0 %v75
  %v122 = vpop.f32.mrb[0].mxu0
  %v123 = vadd.f32 %v30, %v122
  %v124 = vpop.f32.mrb[0].mxu0
  %v125 = vpop.f32.mrb[0].mxu0
  %v126 = vadd.f32 %v31, %v125
  %v127 = vpop.f32.mrb[0].mxu0
  %128 = vmatprep.mubr.bf16.mxu0 0
  %129 = vmatmul.mubr.bf16.gmra.mrb[0].mxu0 %v78
  %v130 = vpop.f32.mrb[0].mxu0
  %v131 = vadd.f32 %v32, %v130
  %v132 = vpop.f32.mrb[0].mxu0
  %v133 = vpop.f32.mrb[0].mxu0
  %v134 = vpop.f32.mrb[0].mxu0
  %135 = vdwg.mxu0
  %136 = vst [vmem:[%s3] sm:$0xff] %v115
  %137 = vst [vmem:[%s3 + $0x8] sm:$0xff] %v118
  %138 = vst [vmem:[%s3 + $0x10] sm:$0xff] %v123
  %139 = vst [vmem:[%s3 + $0x18] sm:$0xff] %v126
  %140 = vst [vmem:[%s3 + $0x20] sm:$0x3] %v131
  // Predicated region
  $region14: #{patch_embedding_forward.1} parent=0 // pred_check
    _
  $region15: #{patch_embedding_forward.1} parent=0 // pred_check_branch
    %142 = sbr.rel (0) target = $region17
  $region16: #{patch_embedding_forward.1} parent=0 // pred_region
    _
  $region17: #{patch_embedding_forward.1} parent=0 // pred_fallthru
    _
  // Predicated region
  $region18: #{patch_embedding_forward.1} parent=0 // pred_check
    _
  $region19: #{patch_embedding_forward.1} parent=0 // pred_check_branch
    %144 = sbr.rel (0) target = $region21
  $region20: #{patch_embedding_forward.1} parent=0 // pred_region
    _
  $region21: #{patch_embedding_forward.1} parent=0 // pred_fallthru
    _

</llo_original>
